<compile_context>
chip_gen: v5e
topology: v5e:2x2
jax: 0.10.0
libtpu: 0.0.40
codegen_flags: <defaults>
</compile_context>

<pallas_src>
import functools

import jax
import jax.numpy as jnp
from jax import lax
from jax.experimental import pallas as pl
from jax.experimental.pallas import tpu as pltpu


_VMEM_LIMIT = 48 * 1024 * 1024  # headroom under v7x's 64 MiB physical VMEM


def _pick_tile(dim, target, align, full_cap=2048):
    """Largest tile <= target that is a multiple of `align` and exactly divides `dim`.

    Falls back to the full dimension (always a legal block) when the dim is small or when no
    reasonable divisor exists (avoids degenerate 8-wide tiles on sizes like 8*197)."""
    if dim <= target:
        return dim
    best = 0
    t = (min(target, dim) // align) * align
    while t >= align:
        if dim % t == 0:
            best = t
            break
        t -= align
    if best * 4 >= target:
        return best
    if dim <= full_cap:
        return dim
    return best if best else dim


# ---------------- tiled linear: out = x @ w + b ----------------

def _linear_kernel(x_ref, w_ref, b_ref, o_ref, acc_ref):
    k = pl.program_id(2)

    @pl.when(k == 0)
    def _():
        acc_ref[...] = jnp.zeros_like(acc_ref)

    acc_ref[...] += jnp.dot(x_ref[...], w_ref[...],
                            preferred_element_type=jnp.float32)

    @pl.when(k == pl.num_programs(2) - 1)
    def _():
        o_ref[...] = (acc_ref[...] + b_ref[...].astype(jnp.float32)).astype(o_ref.dtype)


def pallas_linear(x2d, w, b, *, tm=512, tn=512, tk=512):
    """x2d: (M, Cin), w: (Cin, Cout), b: (Cout,) -> (M, Cout)."""
    M, Cin = x2d.shape
    Cout = w.shape[1]
    tm = _pick_tile(M, tm, 8)
    tn = _pick_tile(Cout, tn, 128)
    tk = _pick_tile(Cin, tk, 128)
    b2d = b.reshape(1, Cout)

    itemsize = jnp.dtype(x2d.dtype).itemsize
    cost = pl.CostEstimate(
        flops=2 * M * Cin * Cout,
        transcendentals=0,
        bytes_accessed=(M * Cin + Cin * Cout + M * Cout + Cout) * itemsize,
    )

    return pl.pallas_call(
        _linear_kernel,
        out_shape=jax.ShapeDtypeStruct((M, Cout), x2d.dtype),
        grid=(pl.cdiv(M, tm), pl.cdiv(Cout, tn), pl.cdiv(Cin, tk)),
        in_specs=[
            pl.BlockSpec((tm, tk), lambda i, j, k: (i, k)),
            pl.BlockSpec((tk, tn), lambda i, j, k: (k, j)),
            pl.BlockSpec((1, tn), lambda i, j, k: (0, j)),
        ],
        out_specs=pl.BlockSpec((tm, tn), lambda i, j, k: (i, j)),
        scratch_shapes=[pltpu.VMEM((tm, tn), jnp.float32)],
        compiler_params=pltpu.CompilerParams(
            dimension_semantics=("parallel", "parallel", "arbitrary"),
            vmem_limit_bytes=_VMEM_LIMIT,
        ),
        cost_estimate=cost,
    )(x2d, w, b2d)


# ---------------- attention (no softmax): out = (q @ k^T / sqrt(hd)) @ v ----------------

def _attn_kernel(q_ref, k_ref, v_ref, o_ref, acc_ref, *, scale):
    ki = pl.program_id(2)

    @pl.when(ki == 0)
    def _():
        acc_ref[...] = jnp.zeros_like(acc_ref)

    q = q_ref[0]  # (H, tq, hd)
    k = k_ref[0]  # (H, tkv, hd)
    v = v_ref[0]  # (H, tkv, hd)

    # scores (H, tq, tkv): contract over head_dim, batch over heads -- no k.T relayout.
    s = lax.dot_general(q, k, (((2,), (2,)), ((0,), (0,))),
                        preferred_element_type=jnp.float32)
    # accumulate scores @ v over the K/V blocks: (H, tq, hd)
    acc_ref[...] += lax.dot_general(s.astype(v.dtype), v, (((2,), (1,)), ((0,), (0,))),
                                    preferred_element_type=jnp.float32)

    @pl.when(ki == pl.num_programs(2) - 1)
    def _():
        nh = acc_ref.shape[0]
        acc = acc_ref[...] * scale  # fold 1/sqrt(hd) once per q block, not per K/V step
        # Concatenate heads along lanes -> single lane-dense (tq, C) store; the HBM result is
        # already in (B, N, C) layout so the downstream reshape for the projection is free.
        out = jnp.concatenate([acc[h] for h in range(nh)], axis=-1)
        o_ref[0] = out.astype(o_ref.dtype)


def pallas_attention(q, k, v, *, tq=256, tkv=512):
    """q, k, v: (B, H, N, hd) -> (B, N, C) with C = H * hd."""
    B, H, N, hd = q.shape
    C = H * hd
    scale = 1.0 / float(hd) ** 0.5
    tq = _pick_tile(N, tq, 8)
    tkv = _pick_tile(N, tkv, 8)

    itemsize = jnp.dtype(q.dtype).itemsize
    cost = pl.CostEstimate(
        flops=4 * B * H * N * N * hd,
        transcendentals=0,
        bytes_accessed=(3 * B * H * N * hd + B * N * C) * itemsize,
    )

    kernel = functools.partial(_attn_kernel, scale=scale)
    q_spec = pl.BlockSpec((1, H, tq, hd), lambda b, qi, ki: (b, 0, qi, 0))
    kv_spec = pl.BlockSpec((1, H, tkv, hd), lambda b, qi, ki: (b, 0, ki, 0))
    o_spec = pl.BlockSpec((1, tq, C), lambda b, qi, ki: (b, qi, 0))

    return pl.pallas_call(
        kernel,
        out_shape=jax.ShapeDtypeStruct((B, N, C), q.dtype),
        grid=(B, pl.cdiv(N, tq), pl.cdiv(N, tkv)),
        in_specs=[q_spec, kv_spec, kv_spec],
        out_specs=o_spec,
        scratch_shapes=[pltpu.VMEM((H, tq, hd), jnp.float32)],
        compiler_params=pltpu.CompilerParams(
            dimension_semantics=("parallel", "parallel", "arbitrary"),
            vmem_limit_bytes=_VMEM_LIMIT,
        ),
        cost_estimate=cost,
    )(q, k, v)


# ---------------- module forward ----------------

def multi_head_attention(x, params, num_heads):
    """Forward pass of the reference MultiHeadAttention module (no softmax, as in the spec)."""
    B, N, C = x.shape
    hd = C // num_heads

    # qkv projection: (B*N, C) @ (C, 3C) + b
    qkv = pallas_linear(x.reshape(B * N, C), params["w_qkv"], params["b_qkv"])
    qkv = qkv.reshape(B, N, 3, num_heads, hd)
    # Single fused slice+transpose per tensor -- the only inter-kernel relayout left.
    # TODO(synk): read q/k/v straight out of the qkv buffer via attention in_specs once the
    #             (tq, H, hd) -> (H, tq, hd) in-kernel relayout is cheap for hd < 128.
    q = jnp.transpose(qkv[:, :, 0], (0, 2, 1, 3))   # (B, H, N, hd)
    k = jnp.transpose(qkv[:, :, 1], (0, 2, 1, 3))
    v = jnp.transpose(qkv[:, :, 2], (0, 2, 1, 3))

    # attention writes (B, N, C) directly -> free reshape to (B*N, C), no relayout.
    out = pallas_attention(q, k, v)

    # output projection
    out = pallas_linear(out.reshape(B * N, C), params["w_proj"], params["b_proj"])
    return out.reshape(B, N, C)


def reference_mha(x, params, num_heads):
    """Pure-JAX reference matching the PyTorch module semantics (no softmax)."""
    B, N, C = x.shape
    hd = C // num_heads
    qkv = x.reshape(B * N, C) @ params["w_qkv"] + params["b_qkv"]
    qkv = qkv.reshape(B, N, 3, num_heads, hd).transpose(2, 0, 3, 1, 4)
    q, k, v = qkv[0], qkv[1], qkv[2]
    attn = jnp.einsum("bhnd,bhmd->bhnm", q, k) / float(hd) ** 0.5
    out = jnp.einsum("bhnm,bhmd->bhnd", attn, v)
    out = out.transpose(0, 2, 1, 3).reshape(B, N, C)
    out = out.reshape(B * N, C) @ params["w_proj"] + params["b_proj"]
    return out.reshape(B, N, C)


if __name__ == "__main__":
    # small shapes consistent with the forward: (B, N, C) with C divisible by num_heads
    B, N, C = 2, 8, 32
    num_heads = 4

    key = jax.random.PRNGKey(0)
    k_x, k_wqkv, k_bqkv, k_wproj, k_bproj = jax.random.split(key, 5)

    x = jax.random.normal(k_x, (B, N, C), dtype=jnp.float32)
    params = {
        "w_qkv": 0.02 * jax.random.normal(k_wqkv, (C, 3 * C), dtype=jnp.float32),
        "b_qkv": 0.02 * jax.random.normal(k_bqkv, (3 * C,), dtype=jnp.float32),
        "w_proj": 0.02 * jax.random.normal(k_wproj, (C, C), dtype=jnp.float32),
        "b_proj": 0.02 * jax.random.normal(k_bproj, (C,), dtype=jnp.float32),
    }

    mha = jax.jit(multi_head_attention, static_argnames=("num_heads",))
    out = mha(x, params, num_heads=num_heads)
    out = jax.block_until_ready(out)

    ref = reference_mha(x, params, num_heads)
    assert out.shape == (B, N, C)
    assert jnp.allclose(out, ref, atol=1e-5, rtol=1e-5), "mismatch vs reference"

    print("KERNEL_OK")
</pallas_src>

<mosaic_0001>
module attributes {stable_mosaic.version = 11 : i64} {
  func.func @_linear_kernel(%arg0: i32, %arg1: i32, %arg2: i32, %arg3: memref<16x32xf32, #tpu.memory_space<vmem>>, %arg4: memref<32x96xf32, #tpu.memory_space<vmem>>, %arg5: memref<1x96xf32, #tpu.memory_space<vmem>>, %arg6: memref<16x96xf32, #tpu.memory_space<vmem>>, %arg7: memref<16x96xf32, #tpu.memory_space<vmem>>) attributes {dimension_semantics = [#tpu.dimension_semantics<parallel>, #tpu.dimension_semantics<parallel>, #tpu.dimension_semantics<arbitrary>], iteration_bounds = array<i64: 1, 1, 1>, scalar_prefetch = 0 : i64, scratch_operands = 1 : i64, tpu.core_type = #tpu.core_type<tc>, window_params = [{transform_indices = @transform_0, window_bounds = array<i64: 16, 32>}, {transform_indices = @transform_1, window_bounds = array<i64: 32, 96>}, {transform_indices = @transform_2, window_bounds = array<i64: 1, 96>}, {transform_indices = @transform_3, window_bounds = array<i64: 16, 96>}]} {
    %c0_i32 = arith.constant 0 : i32
    %0 = arith.cmpi eq, %arg2, %c0_i32 : i32
    %1 = arith.extui %0 : i1 to i32
    %c0_i32_0 = arith.constant 0 : i32
    %2 = arith.cmpi ne, %1, %c0_i32_0 : i32
    scf.if %2 {
      %cst_10 = arith.constant 0.000000e+00 : f32
      %12 = vector.broadcast %cst_10 : f32 to vector<16x96xf32>
      %c0_11 = arith.constant 0 : index
      %c0_12 = arith.constant 0 : index
      %13 = vector.load %arg7[%c0_11, %c0_12] : memref<16x96xf32, #tpu.memory_space<vmem>>, vector<16x96xf32>
      tpu.vector_store %arg7[%c0_11, %c0_12], %12 {strides = array<i32>} : memref<16x96xf32, #tpu.memory_space<vmem>>, vector<16x96xf32>,
    } else {
    }
    %c0 = arith.constant 0 : index
    %c0_1 = arith.constant 0 : index
    %3 = vector.load %arg7[%c0, %c0_1] : memref<16x96xf32, #tpu.memory_space<vmem>>, vector<16x96xf32>
    %c0_2 = arith.constant 0 : index
    %c0_3 = arith.constant 0 : index
    %4 = vector.load %arg3[%c0_2, %c0_3] : memref<16x32xf32, #tpu.memory_space<vmem>>, vector<16x32xf32>
    %c0_4 = arith.constant 0 : index
    %c0_5 = arith.constant 0 : index
    %5 = vector.load %arg4[%c0_4, %c0_5] : memref<32x96xf32, #tpu.memory_space<vmem>>, vector<32x96xf32>
    %cst = arith.constant dense<0.000000e+00> : vector<16x96xf32>
    %6 = tpu.matmul %4, %5, %cst {dimension_numbers = #tpu.dot_dimension_numbers<[1], [0], [0], [1], [0, 0, 1, 1], [], []>} : vector<16x32xf32>, vector<32x96xf32>, vector<16x96xf32> -> vector<16x96xf32>
    %7 = arith.addf %3, %6 : vector<16x96xf32>
    %c0_6 = arith.constant 0 : index
    %c0_7 = arith.constant 0 : index
    %8 = vector.load %arg7[%c0_6, %c0_7] : memref<16x96xf32, #tpu.memory_space<vmem>>, vector<16x96xf32>
    tpu.vector_store %arg7[%c0_6, %c0_7], %7 {strides = array<i32>} : memref<16x96xf32, #tpu.memory_space<vmem>>, vector<16x96xf32>,
    %c0_i32_8 = arith.constant 0 : i32
    %9 = arith.cmpi eq, %arg2, %c0_i32_8 : i32
    %10 = arith.extui %9 : i1 to i32
    %c0_i32_9 = arith.constant 0 : i32
    %11 = arith.cmpi ne, %10, %c0_i32_9 : i32
    scf.if %11 {
      %c0_10 = arith.constant 0 : index
      %c0_11 = arith.constant 0 : index
      %12 = vector.load %arg7[%c0_10, %c0_11] : memref<16x96xf32, #tpu.memory_space<vmem>>, vector<16x96xf32>
      %c0_12 = arith.constant 0 : index
      %c0_13 = arith.constant 0 : index
      %13 = vector.load %arg5[%c0_12, %c0_13] : memref<1x96xf32, #tpu.memory_space<vmem>>, vector<1x96xf32>
      %14 = vector.broadcast %13 : vector<1x96xf32> to vector<16x96xf32>
      %15 = arith.addf %12, %14 : vector<16x96xf32>
      %c0_14 = arith.constant 0 : index
      %c0_15 = arith.constant 0 : index
      %16 = vector.load %arg6[%c0_14, %c0_15] : memref<16x96xf32, #tpu.memory_space<vmem>>, vector<16x96xf32>
      tpu.vector_store %arg6[%c0_14, %c0_15], %15 {strides = array<i32>} : memref<16x96xf32, #tpu.memory_space<vmem>>, vector<16x96xf32>,
    } else {
    }
    return
  }
  func.func @transform_0(%arg0: i32, %arg1: i32, %arg2: i32) -> (i32, i32) {
    %c0_i32 = arith.constant 0 : i32
    return %arg0, %arg2 : i32, i32
  }
  func.func @transform_1(%arg0: i32, %arg1: i32, %arg2: i32) -> (i32, i32) {
    %c0_i32 = arith.constant 0 : i32
    return %arg2, %arg1 : i32, i32
  }
  func.func @transform_2(%arg0: i32, %arg1: i32, %arg2: i32) -> (i32, i32) {
    %c0_i32 = arith.constant 0 : i32
    %c0_i32_0 = arith.constant 0 : i32
    return %c0_i32, %arg1 : i32, i32
  }
  func.func @transform_3(%arg0: i32, %arg1: i32, %arg2: i32) -> (i32, i32) {
    %c0_i32 = arith.constant 0 : i32
    return %arg0, %arg1 : i32, i32
  }
}

module attributes {stable_mosaic.version = 11 : i64} {
  func.func @_linear_kernel(%arg0: i32, %arg1: i32, %arg2: i32, %arg3: memref<16x32xf32, #tpu.memory_space<vmem>>, %arg4: memref<32x32xf32, #tpu.memory_space<vmem>>, %arg5: memref<1x32xf32, #tpu.memory_space<vmem>>, %arg6: memref<16x32xf32, #tpu.memory_space<vmem>>, %arg7: memref<16x32xf32, #tpu.memory_space<vmem>>) attributes {dimension_semantics = [#tpu.dimension_semantics<parallel>, #tpu.dimension_semantics<parallel>, #tpu.dimension_semantics<arbitrary>], iteration_bounds = array<i64: 1, 1, 1>, scalar_prefetch = 0 : i64, scratch_operands = 1 : i64, tpu.core_type = #tpu.core_type<tc>, window_params = [{transform_indices = @transform_0, window_bounds = array<i64: 16, 32>}, {transform_indices = @transform_1, window_bounds = array<i64: 32, 32>}, {transform_indices = @transform_2, window_bounds = array<i64: 1, 32>}, {transform_indices = @transform_3, window_bounds = array<i64: 16, 32>}]} {
    %c0_i32 = arith.constant 0 : i32
    %0 = arith.cmpi eq, %arg2, %c0_i32 : i32
    %1 = arith.extui %0 : i1 to i32
    %c0_i32_0 = arith.constant 0 : i32
    %2 = arith.cmpi ne, %1, %c0_i32_0 : i32
    scf.if %2 {
      %cst_10 = arith.constant 0.000000e+00 : f32
      %12 = vector.broadcast %cst_10 : f32 to vector<16x32xf32>
      %c0_11 = arith.constant 0 : index
      %c0_12 = arith.constant 0 : index
      %13 = vector.load %arg7[%c0_11, %c0_12] : memref<16x32xf32, #tpu.memory_space<vmem>>, vector<16x32xf32>
      tpu.vector_store %arg7[%c0_11, %c0_12], %12 {strides = array<i32>} : memref<16x32xf32, #tpu.memory_space<vmem>>, vector<16x32xf32>,
    } else {
    }
    %c0 = arith.constant 0 : index
    %c0_1 = arith.constant 0 : index
    %3 = vector.load %arg7[%c0, %c0_1] : memref<16x32xf32, #tpu.memory_space<vmem>>, vector<16x32xf32>
    %c0_2 = arith.constant 0 : index
    %c0_3 = arith.constant 0 : index
    %4 = vector.load %arg3[%c0_2, %c0_3] : memref<16x32xf32, #tpu.memory_space<vmem>>, vector<16x32xf32>
    %c0_4 = arith.constant 0 : index
    %c0_5 = arith.constant 0 : index
    %5 = vector.load %arg4[%c0_4, %c0_5] : memref<32x32xf32, #tpu.memory_space<vmem>>, vector<32x32xf32>
    %cst = arith.constant dense<0.000000e+00> : vector<16x32xf32>
    %6 = tpu.matmul %4, %5, %cst {dimension_numbers = #tpu.dot_dimension_numbers<[1], [0], [0], [1], [0, 0, 1, 1], [], []>} : vector<16x32xf32>, vector<32x32xf32>, vector<16x32xf32> -> vector<16x32xf32>
    %7 = arith.addf %3, %6 : vector<16x32xf32>
    %c0_6 = arith.constant 0 : index
    %c0_7 = arith.constant 0 : index
    %8 = vector.load %arg7[%c0_6, %c0_7] : memref<16x32xf32, #tpu.memory_space<vmem>>, vector<16x32xf32>
    tpu.vector_store %arg7[%c0_6, %c0_7], %7 {strides = array<i32>} : memref<16x32xf32, #tpu.memory_space<vmem>>, vector<16x32xf32>,
    %c0_i32_8 = arith.constant 0 : i32
    %9 = arith.cmpi eq, %arg2, %c0_i32_8 : i32
    %10 = arith.extui %9 : i1 to i32
    %c0_i32_9 = arith.constant 0 : i32
    %11 = arith.cmpi ne, %10, %c0_i32_9 : i32
    scf.if %11 {
      %c0_10 = arith.constant 0 : index
      %c0_11 = arith.constant 0 : index
      %12 = vector.load %arg7[%c0_10, %c0_11] : memref<16x32xf32, #tpu.memory_space<vmem>>, vector<16x32xf32>
      %c0_12 = arith.constant 0 : index
      %c0_13 = arith.constant 0 : index
      %13 = vector.load %arg5[%c0_12, %c0_13] : memref<1x32xf32, #tpu.memory_space<vmem>>, vector<1x32xf32>
      %14 = vector.broadcast %13 : vector<1x32xf32> to vector<16x32xf32>
      %15 = arith.addf %12, %14 : vector<16x32xf32>
      %c0_14 = arith.constant 0 : index
      %c0_15 = arith.constant 0 : index
      %16 = vector.load %arg6[%c0_14, %c0_15] : memref<16x32xf32, #tpu.memory_space<vmem>>, vector<16x32xf32>
      tpu.vector_store %arg6[%c0_14, %c0_15], %15 {strides = array<i32>} : memref<16x32xf32, #tpu.memory_space<vmem>>, vector<16x32xf32>,
    } else {
    }
    return
  }
  func.func @transform_0(%arg0: i32, %arg1: i32, %arg2: i32) -> (i32, i32) {
    %c0_i32 = arith.constant 0 : i32
    return %arg0, %arg2 : i32, i32
  }
  func.func @transform_1(%arg0: i32, %arg1: i32, %arg2: i32) -> (i32, i32) {
    %c0_i32 = arith.constant 0 : i32
    return %arg2, %arg1 : i32, i32
  }
  func.func @transform_2(%arg0: i32, %arg1: i32, %arg2: i32) -> (i32, i32) {
    %c0_i32 = arith.constant 0 : i32
    %c0_i32_0 = arith.constant 0 : i32
    return %c0_i32, %arg1 : i32, i32
  }
  func.func @transform_3(%arg0: i32, %arg1: i32, %arg2: i32) -> (i32, i32) {
    %c0_i32 = arith.constant 0 : i32
    return %arg0, %arg1 : i32, i32
  }
}

module attributes {stable_mosaic.version = 11 : i64} {
  func.func @_attn_kernel(%arg0: i32, %arg1: i32, %arg2: i32, %arg3: memref<1x4x8x8xf32, #tpu.memory_space<vmem>>, %arg4: memref<1x4x8x8xf32, #tpu.memory_space<vmem>>, %arg5: memref<1x4x8x8xf32, #tpu.memory_space<vmem>>, %arg6: memref<1x8x32xf32, #tpu.memory_space<vmem>>, %arg7: memref<4x8x8xf32, #tpu.memory_space<vmem>>) attributes {dimension_semantics = [#tpu.dimension_semantics<parallel>, #tpu.dimension_semantics<parallel>, #tpu.dimension_semantics<arbitrary>], iteration_bounds = array<i64: 2, 1, 1>, scalar_prefetch = 0 : i64, scratch_operands = 1 : i64, tpu.core_type = #tpu.core_type<tc>, window_params = [{transform_indices = @transform_0, window_bounds = array<i64: 1, 4, 8, 8>}, {transform_indices = @transform_1, window_bounds = array<i64: 1, 4, 8, 8>}, {transform_indices = @transform_2, window_bounds = array<i64: 1, 4, 8, 8>}, {transform_indices = @transform_3, window_bounds = array<i64: 1, 8, 32>}]} {
    %c0_i32 = arith.constant 0 : i32
    %0 = arith.cmpi eq, %arg2, %c0_i32 : i32
    %1 = arith.extui %0 : i1 to i32
    %c0_i32_0 = arith.constant 0 : i32
    %2 = arith.cmpi ne, %1, %c0_i32_0 : i32
    scf.if %2 {
      %cst_21 = arith.constant 0.000000e+00 : f32
      %17 = vector.broadcast %cst_21 : f32 to vector<4x8x8xf32>
      %c0_22 = arith.constant 0 : index
      %c0_23 = arith.constant 0 : index
      %c0_24 = arith.constant 0 : index
      %18 = vector.load %arg7[%c0_22, %c0_23, %c0_24] : memref<4x8x8xf32, #tpu.memory_space<vmem>>, vector<4x8x8xf32>
      tpu.vector_store %arg7[%c0_22, %c0_23, %c0_24], %17 {strides = array<i32>} : memref<4x8x8xf32, #tpu.memory_space<vmem>>, vector<4x8x8xf32>,
    } else {
    }
    %c0 = arith.constant 0 : index
    %c0_1 = arith.constant 0 : index
    %c0_2 = arith.constant 0 : index
    %c0_3 = arith.constant 0 : index
    %3 = vector.load %arg3[%c0, %c0_1, %c0_2, %c0_3] : memref<1x4x8x8xf32, #tpu.memory_space<vmem>>, vector<1x4x8x8xf32>
    %4 = vector.shape_cast %3 : vector<1x4x8x8xf32> to vector<4x8x8xf32>
    %c0_4 = arith.constant 0 : index
    %c0_5 = arith.constant 0 : index
    %c0_6 = arith.constant 0 : index
    %c0_7 = arith.constant 0 : index
    %5 = vector.load %arg4[%c0_4, %c0_5, %c0_6, %c0_7] : memref<1x4x8x8xf32, #tpu.memory_space<vmem>>, vector<1x4x8x8xf32>
    %6 = vector.shape_cast %5 : vector<1x4x8x8xf32> to vector<4x8x8xf32>
    %c0_8 = arith.constant 0 : index
    %c0_9 = arith.constant 0 : index
    %c0_10 = arith.constant 0 : index
    %c0_11 = arith.constant 0 : index
    %7 = vector.load %arg5[%c0_8, %c0_9, %c0_10, %c0_11] : memref<1x4x8x8xf32, #tpu.memory_space<vmem>>, vector<1x4x8x8xf32>
    %8 = vector.shape_cast %7 : vector<1x4x8x8xf32> to vector<4x8x8xf32>
    %cst = arith.constant dense<0.000000e+00> : vector<4x8x8xf32>
    %9 = tpu.matmul %4, %6, %cst {dimension_numbers = #tpu.dot_dimension_numbers<[2], [2], [1], [1], [0, 0, 0, 1, 1, 1], [0], [0]>} : vector<4x8x8xf32>, vector<4x8x8xf32>, vector<4x8x8xf32> -> vector<4x8x8xf32>
    %c0_12 = arith.constant 0 : index
    %c0_13 = arith.constant 0 : index
    %c0_14 = arith.constant 0 : index
    %10 = vector.load %arg7[%c0_12, %c0_13, %c0_14] : memref<4x8x8xf32, #tpu.memory_space<vmem>>, vector<4x8x8xf32>
    %cst_15 = arith.constant dense<0.000000e+00> : vector<4x8x8xf32>
    %11 = tpu.matmul %9, %8, %cst_15 {dimension_numbers = #tpu.dot_dimension_numbers<[2], [1], [1], [2], [0, 0, 0, 1, 1, 2], [0], [0]>} : vector<4x8x8xf32>, vector<4x8x8xf32>, vector<4x8x8xf32> -> vector<4x8x8xf32>
    %12 = arith.addf %10, %11 : vector<4x8x8xf32>
    %c0_16 = arith.constant 0 : index
    %c0_17 = arith.constant 0 : index
    %c0_18 = arith.constant 0 : index
    %13 = vector.load %arg7[%c0_16, %c0_17, %c0_18] : memref<4x8x8xf32, #tpu.memory_space<vmem>>, vector<4x8x8xf32>
    tpu.vector_store %arg7[%c0_16, %c0_17, %c0_18], %12 {strides = array<i32>} : memref<4x8x8xf32, #tpu.memory_space<vmem>>, vector<4x8x8xf32>,
    %c0_i32_19 = arith.constant 0 : i32
    %14 = arith.cmpi eq, %arg2, %c0_i32_19 : i32
    %15 = arith.extui %14 : i1 to i32
    %c0_i32_20 = arith.constant 0 : i32
    %16 = arith.cmpi ne, %15, %c0_i32_20 : i32
    scf.if %16 {
      %c0_21 = arith.constant 0 : index
      %c0_22 = arith.constant 0 : index
      %c0_23 = arith.constant 0 : index
      %17 = vector.load %arg7[%c0_21, %c0_22, %c0_23] : memref<4x8x8xf32, #tpu.memory_space<vmem>>, vector<4x8x8xf32>
      %cst_24 = arith.constant 0.353553385 : f32
      %18 = vector.broadcast %cst_24 : f32 to vector<4x8x8xf32>
      %19 = arith.mulf %17, %18 : vector<4x8x8xf32>
      %20 = vector.extract_strided_slice %19 {offsets = [0, 0, 0], sizes = [1, 8, 8], strides = [1, 1, 1]} : vector<4x8x8xf32> to vector<1x8x8xf32>
      %21 = vector.shape_cast %20 : vector<1x8x8xf32> to vector<8x8xf32>
      %22 = vector.extract_strided_slice %19 {offsets = [1, 0, 0], sizes = [1, 8, 8], strides = [1, 1, 1]} : vector<4x8x8xf32> to vector<1x8x8xf32>
      %23 = vector.shape_cast %22 : vector<1x8x8xf32> to vector<8x8xf32>
      %24 = vector.extract_strided_slice %19 {offsets = [2, 0, 0], sizes = [1, 8, 8], strides = [1, 1, 1]} : vector<4x8x8xf32> to vector<1x8x8xf32>
      %25 = vector.shape_cast %24 : vector<1x8x8xf32> to vector<8x8xf32>
      %26 = vector.extract_strided_slice %19 {offsets = [3, 0, 0], sizes = [1, 8, 8], strides = [1, 1, 1]} : vector<4x8x8xf32> to vector<1x8x8xf32>
      %27 = vector.shape_cast %26 : vector<1x8x8xf32> to vector<8x8xf32>
      %28 = tpu.concatenate %21, %23, %25, %27 in 1 : vector<8x8xf32>, vector<8x8xf32>, vector<8x8xf32>, vector<8x8xf32> -> vector<8x32xf32>
      %c0_25 = arith.constant 0 : index
      %c0_26 = arith.constant 0 : index
      %c0_27 = arith.constant 0 : index
      %29 = vector.load %arg6[%c0_25, %c0_26, %c0_27] : memref<1x8x32xf32, #tpu.memory_space<vmem>>, vector<1x8x32xf32>
      %30 = vector.shape_cast %29 : vector<1x8x32xf32> to vector<8x32xf32>
      %31 = vector.shape_cast %28 : vector<8x32xf32> to vector<1x8x32xf32>
      tpu.vector_store %arg6[%c0_25, %c0_26, %c0_27], %31 {strides = array<i32>} : memref<1x8x32xf32, #tpu.memory_space<vmem>>, vector<1x8x32xf32>,
    } else {
    }
    return
  }
  func.func @transform_0(%arg0: i32, %arg1: i32, %arg2: i32) -> (i32, i32, i32, i32) {
    %c0_i32 = arith.constant 0 : i32
    %c0_i32_0 = arith.constant 0 : i32
    %c0_i32_1 = arith.constant 0 : i32
    return %arg0, %c0_i32, %arg1, %c0_i32_0 : i32, i32, i32, i32
  }
  func.func @transform_1(%arg0: i32, %arg1: i32, %arg2: i32) -> (i32, i32, i32, i32) {
    %c0_i32 = arith.constant 0 : i32
    %c0_i32_0 = arith.constant 0 : i32
    %c0_i32_1 = arith.constant 0 : i32
    return %arg0, %c0_i32, %arg2, %c0_i32_0 : i32, i32, i32, i32
  }
  func.func @transform_2(%arg0: i32, %arg1: i32, %arg2: i32) -> (i32, i32, i32, i32) {
    %c0_i32 = arith.constant 0 : i32
    %c0_i32_0 = arith.constant 0 : i32
    %c0_i32_1 = arith.constant 0 : i32
    return %arg0, %c0_i32, %arg2, %c0_i32_0 : i32, i32, i32, i32
  }
  func.func @transform_3(%arg0: i32, %arg1: i32, %arg2: i32) -> (i32, i32, i32) {
    %c0_i32 = arith.constant 0 : i32
    %c0_i32_0 = arith.constant 0 : i32
    return %arg0, %arg1, %c0_i32 : i32, i32, i32
  }
}

</mosaic_0001>

<llo_original>
// kernel: multi_head_attention.5
$region0: #{multi_head_attention.5}
  #allocation0 [shape = 'u32[]', space=smem, size = 0x4, offset = 0x4, fixed_abs, tag = 'smem constant byte address 0x4 - core index']
  #allocation1 [shape = 'u32[72,128]{1,0:T(1,128)}', space=vmem, size = 0x9000, scoped, tag = 'internal scratch']
  #allocation2 [shape = 'f32[16,32]{1,0:T(8,128)}', space=vmem, size = 0x2000, scoped, tag = 'scratch operand']
  %s0 = inlined_call_operand.vmem [shape: f32[16,32], index: 0, kind: input, shape index: {}]
  %s1 = inlined_call_operand.vmem [shape: f32[32,32], index: 1, kind: input, shape index: {}]
  %s2 = inlined_call_operand.vmem [shape: f32[1,32], index: 2, kind: input, shape index: {}]
  %s3 = inlined_call_operand.hbm [shape: f32[16,32], index: 3, kind: output, shape index: {}]
  %s4 = sld [smem:[#allocation0]]
  $region30: #{multi_head_attention.5} parent=0
    _
  %s6 = ssub.s32 1, %s4
  %s7 = scalar_select 0, %s6, %s4
  $region1: #{multi_head_attention.5} parent=0
    #allocation3 [shape = 'u8[8192]{0}', space=vmem, size = 0x2000, scoped, tag = 'output window, operand 0, single buffered']
    #allocation4 [shape = 's32[1]{0}', space=sflag, size = 0x4, scoped, tag = 'scoped memory for multi_head_attention.5']
    %8 = vsyncpa [#allocation4], 0
    // Predicated region
    $region2: #{multi_head_attention.5} parent=1 // pred_check
      _
    $region3: #{multi_head_attention.5} parent=1 // pred_check_branch
      %10 = sbr.rel (0) target = $region5
    $region4: #{multi_head_attention.5} parent=1 // pred_region
      _
    $region5: #{multi_head_attention.5} parent=1 // pred_fallthru
      _
    // Predicated region
    $region6: #{multi_head_attention.5} parent=1 // pred_check
      _
    $region7: #{multi_head_attention.5} parent=1 // pred_check_branch
      %12 = sbr.rel (0) target = $region9
    $region8: #{multi_head_attention.5} parent=1 // pred_region
      _
    $region9: #{multi_head_attention.5} parent=1 // pred_fallthru
      _
    // Predicated region
    $region10: #{multi_head_attention.5} parent=1 // pred_check
      _
    $region11: #{multi_head_attention.5} parent=1 // pred_check_branch
      %14 = sbr.rel (0) target = $region13
    $region12: #{multi_head_attention.5} parent=1 // pred_region
      _
    $region13: #{multi_head_attention.5} parent=1 // pred_fallthru
      _
    %p15 = scmp.eq.s32.totalorder 0, 0
    // Predicated region
    $region14: #{multi_head_attention.5} parent=1 // pred_check
      %p16 = pneg %p15
    $region15: #{multi_head_attention.5} parent=1 // pred_check_branch
      %18 = sbr.rel (%p16) target = $region17
    $region16: #{multi_head_attention.5} parent=1 // pred_region
      %vm19 = vcmask 261120
      %20 = vst.msk [vmem:[#allocation2] sm:$0xff] %vm19, 0.0
      %21 = vst.msk [vmem:[#allocation2 + $0x8] sm:$0xff] %vm19, 0.0
    $region17: #{multi_head_attention.5} parent=1 // pred_fallthru
      _
    %v22 = vld [vmem:[#allocation2] sm:$0xff]
    %v23 = vld [vmem:[#allocation2 + $0x8] sm:$0xff]
    %v24 = vld [vmem:[%s0] sm:$0xff]
    %v25 = vld [vmem:[%s0 + $0x8] sm:$0xff]
    %v26 = vld [vmem:[%s1] sm:$0xff]
    %v27 = vld [vmem:[%s1 + $0x8] sm:$0xff]
    %v28 = vld [vmem:[%s1 + $0x10] sm:$0xff]
    %v29 = vld [vmem:[%s1 + $0x18] sm:$0xff]
    %vm30 = vcmask 261120
    %v32 = vsel %vm30, %v24, 0
    %v35 = vsel %vm30, %v25, 0
    %37 = vmatpush.msra.mxu0 0.0
    %38 = vmatpush.msra.mxu0 0.0
    %39 = vmatpush.msra.mxu0 0.0
    %40 = vmatpush.msra.mxu0 0.0
    %41 = vmatpush.msra.mxu0 0.0
    %42 = vmatpush.msra.mxu0 0.0
    %43 = vmatpush.msra.mxu0 0.0
    %44 = vmatpush.msra.mxu0 0.0
    %45 = vmatpush.msra.mxu0 0.0
    %46 = vmatpush.msra.mxu0 0.0
    %47 = vmatpush.msra.mxu0 0.0
    %48 = vmatpush.msra.mxu0 0.0
    %49 = vmatpush.msra.mxu0 %v29
    %50 = vmatpush.msra.mxu0 %v28
    %51 = vmatpush.msra.mxu0 %v27
    %52 = vmatpush.msra.mxu0 %v26
    %53 = vmatmul.f32.gmra.mxu0 %v32
    %v54 = vpop.f32.mrf.mxu0
    %v55 = vadd.f32 0.0, %v54
    %56 = vmatmul.f32.gmra.mxu0 %v35
    %v57 = vpop.f32.mrf.mxu0
    %v58 = vadd.f32 0.0, %v57
    %59 = vdwg.mxu0
    %v60 = vadd.f32 %v22, %v55
    %v61 = vadd.f32 %v23, %v58
    %62 = vst.msk [vmem:[#allocation2] sm:$0xff] %vm30, %v60
    %63 = vst.msk [vmem:[#allocation2 + $0x8] sm:$0xff] %vm30, %v61
    // Predicated region
    $region18: #{multi_head_attention.5} parent=1 // pred_check
      %p64 = pneg %p15
    $region19: #{multi_head_attention.5} parent=1 // pred_check_branch
      %66 = sbr.rel (%p64) target = $region21
    $region20: #{multi_head_attention.5} parent=1 // pred_region
      %v67 = vld [vmem:[#allocation2] sm:$0xff]
      %v68 = vld [vmem:[#allocation2 + $0x8] sm:$0xff]
      %v69 = vld [vmem:[%s2] sm:$0x1]
      %v71 = vperm.slane %v69, 0
      %v73 = vadd.f32 %v67, %v71
      %v74 = vadd.f32 %v68, %v71
      %75 = vst.msk [vmem:[#allocation3] sm:$0xff] %vm30, %v73
      %76 = vst.msk [vmem:[#allocation3 + $0x8] sm:$0xff] %vm30, %v74
    $region21: #{multi_head_attention.5} parent=1 // pred_fallthru
      _
    // Predicated region
    $region22: #{multi_head_attention.5} parent=1 // pred_check
      _
    $region23: #{multi_head_attention.5} parent=1 // pred_check_branch
      %78 = sbr.rel (0) target = $region25
    $region24: #{multi_head_attention.5} parent=1 // pred_region
      %80 = vsyncadd [#allocation4], 0
      %s81 = sshll.u32 [#allocation3], 4
      %s82 = int_to_ptr.vmem [resolvable:$true] %s81
      %s83 = sshll.u32 %s3, 4
      %s84 = int_to_ptr.hbm [resolvable:$true] %s83
      %89 = dma.vmem_to_hbm [thread:$0]  %s82, 256, %s84, [#allocation4], 128, 128, 8
    $region25: #{multi_head_attention.5} parent=1 // pred_fallthru
      _
    // Predicated region
    $region26: #{multi_head_attention.5} parent=1 // pred_check
      _
    $region27: #{multi_head_attention.5} parent=1 // pred_check_branch
      %91 = sbr.rel (0) target = $region29
    $region28: #{multi_head_attention.5} parent=1 // pred_region
      %93 = dma.done [#allocation4], 256
    $region29: #{multi_head_attention.5} parent=1 // pred_fallthru
      _
    %94 = vsyncpa [#allocation4], 1

// kernel: multi_head_attention.3
$region0: #{multi_head_attention.3}
  #allocation0 [shape = 'u32[]', space=smem, size = 0x4, offset = 0x4, fixed_abs, tag = 'smem constant byte address 0x4 - core index']
  #allocation1 [shape = 'u32[72,128]{1,0:T(1,128)}', space=vmem, size = 0x9000, scoped, tag = 'internal scratch']
  #allocation2 [shape = 'f32[16,96]{1,0:T(8,128)}', space=vmem, size = 0x2000, scoped, tag = 'scratch operand']
  %s0 = inlined_call_operand.hbm [shape: f32[16,32], index: 0, kind: input, shape index: {}]
  %s1 = inlined_call_operand.hbm [shape: f32[32,96], index: 1, kind: input, shape index: {}]
  %s2 = inlined_call_operand.vmem [shape: f32[1,96], index: 2, kind: input, shape index: {}]
  %s3 = inlined_call_operand.vmem [shape: f32[16,96], index: 3, kind: output, shape index: {}]
  %s4 = sld [smem:[#allocation0]]
  $region38: #{multi_head_attention.3} parent=0
    _
  %s6 = ssub.s32 1, %s4
  %s7 = scalar_select 0, %s6, %s4
  $region1: #{multi_head_attention.3} parent=0
    #allocation3 [shape = 'u8[8192]{0}', space=vmem, size = 0x2000, scoped, tag = 'input window, operand 0, single buffered']
    #allocation4 [shape = 's32[1]{0}', space=sflag, size = 0x4, scoped, tag = 'scoped memory for multi_head_attention.3']
    #allocation5 [shape = 'u8[16384]{0}', space=vmem, size = 0x4000, scoped, tag = 'input window, operand 1, single buffered']
    #allocation6 [shape = 's32[1]{0}', space=sflag, size = 0x4, scoped, tag = 'scoped memory for multi_head_attention.3']
    %8 = vsyncpa [#allocation4], 0
    %9 = vsyncpa [#allocation6], 0
    // Predicated region
    $region2: #{multi_head_attention.3} parent=1 // pred_check
      _
    $region3: #{multi_head_attention.3} parent=1 // pred_check_branch
      %11 = sbr.rel (0) target = $region5
    $region4: #{multi_head_attention.3} parent=1 // pred_region
      %13 = vsyncadd [#allocation4], 0
      %s14 = sshll.u32 %s0, 4
      %s15 = int_to_ptr.hbm [resolvable:$true] %s14
      %s16 = sshll.u32 [#allocation3], 4
      %s17 = int_to_ptr.vmem [resolvable:$true] %s16
      %22 = dma.hbm_to_vmem [thread:$0]  %s15, 256, %s17, [#allocation4], 128, 128, 8
    $region5: #{multi_head_attention.3} parent=1 // pred_fallthru
      _
    // Predicated region
    $region6: #{multi_head_attention.3} parent=1 // pred_check
      _
    $region7: #{multi_head_attention.3} parent=1 // pred_check_branch
      %24 = sbr.rel (0) target = $region9
    $region8: #{multi_head_attention.3} parent=1 // pred_region
      %26 = vsyncadd [#allocation6], 0
      %s27 = sshll.u32 %s1, 4
      %s28 = int_to_ptr.hbm [resolvable:$true] %s27
      %s29 = sshll.u32 [#allocation5], 4
      %s30 = int_to_ptr.vmem [resolvable:$true] %s29
      %35 = dma.hbm_to_vmem [thread:$0]  %s28, 512, %s30, [#allocation6], 128, 128, 8
    $region9: #{multi_head_attention.3} parent=1 // pred_fallthru
      _
    // Predicated region
    $region10: #{multi_head_attention.3} parent=1 // pred_check
      _
    $region11: #{multi_head_attention.3} parent=1 // pred_check_branch
      %37 = sbr.rel (0) target = $region13
    $region12: #{multi_head_attention.3} parent=1 // pred_region
      _
    $region13: #{multi_head_attention.3} parent=1 // pred_fallthru
      _
    // Predicated region
    $region14: #{multi_head_attention.3} parent=1 // pred_check
      _
    $region15: #{multi_head_attention.3} parent=1 // pred_check_branch
      %39 = sbr.rel (0) target = $region17
    $region16: #{multi_head_attention.3} parent=1 // pred_region
      %41 = dma.done [#allocation4], 256
    $region17: #{multi_head_attention.3} parent=1 // pred_fallthru
      _
    // Predicated region
    $region18: #{multi_head_attention.3} parent=1 // pred_check
      _
    $region19: #{multi_head_attention.3} parent=1 // pred_check_branch
      %43 = sbr.rel (0) target = $region21
    $region20: #{multi_head_attention.3} parent=1 // pred_region
      %45 = dma.done [#allocation6], 512
    $region21: #{multi_head_attention.3} parent=1 // pred_fallthru
      _
    %p46 = scmp.eq.s32.totalorder 0, 0
    // Predicated region
    $region22: #{multi_head_attention.3} parent=1 // pred_check
      %p47 = pneg %p46
    $region23: #{multi_head_attention.3} parent=1 // pred_check_branch
      %49 = sbr.rel (%p47) target = $region25
    $region24: #{multi_head_attention.3} parent=1 // pred_region
      %vm50 = vcmask 785408
      %51 = vst.msk [vmem:[#allocation2] sm:$0xff] %vm50, 0.0
      %52 = vst.msk [vmem:[#allocation2 + $0x8] sm:$0xff] %vm50, 0.0
    $region25: #{multi_head_attention.3} parent=1 // pred_fallthru
      _
    %v53 = vld [vmem:[#allocation2] sm:$0xff]
    %v54 = vld [vmem:[#allocation2 + $0x8] sm:$0xff]
    %v55 = vld [vmem:[#allocation3] sm:$0xff]
    %v56 = vld [vmem:[#allocation3 + $0x8] sm:$0xff]
    %v57 = vld [vmem:[#allocation5] sm:$0xff]
    %v58 = vld [vmem:[#allocation5 + $0x8] sm:$0xff]
    %v59 = vld [vmem:[#allocation5 + $0x10] sm:$0xff]
    %v60 = vld [vmem:[#allocation5 + $0x18] sm:$0xff]
    %vm61 = vcmask 261120
    %v63 = vsel %vm61, %v55, 0
    %v66 = vsel %vm61, %v56, 0
    %68 = vmatpush.msra.mxu0 0.0
    %69 = vmatpush.msra.mxu0 0.0
    %70 = vmatpush.msra.mxu0 0.0
    %71 = vmatpush.msra.mxu0 0.0
    %72 = vmatpush.msra.mxu0 0.0
    %73 = vmatpush.msra.mxu0 0.0
    %74 = vmatpush.msra.mxu0 0.0
    %75 = vmatpush.msra.mxu0 0.0
    %76 = vmatpush.msra.mxu0 0.0
    %77 = vmatpush.msra.mxu0 0.0
    %78 = vmatpush.msra.mxu0 0.0
    %79 = vmatpush.msra.mxu0 0.0
    %80 = vmatpush.msra.mxu0 %v60
    %81 = vmatpush.msra.mxu0 %v59
    %82 = vmatpush.msra.mxu0 %v58
    %83 = vmatpush.msra.mxu0 %v57
    %84 = vmatmul.f32.gmra.mxu0 %v63
    %v85 = vpop.f32.mrf.mxu0
    %v86 = vadd.f32 0.0, %v85
    %87 = vmatmul.f32.gmra.mxu0 %v66
    %v88 = vpop.f32.mrf.mxu0
    %v89 = vadd.f32 0.0, %v88
    %90 = vdwg.mxu0
    %v91 = vadd.f32 %v53, %v86
    %v92 = vadd.f32 %v54, %v89
    %vm93 = vcmask 785408
    %94 = vst.msk [vmem:[#allocation2] sm:$0xff] %vm93, %v91
    %95 = vst.msk [vmem:[#allocation2 + $0x8] sm:$0xff] %vm93, %v92
    // Predicated region
    $region26: #{multi_head_attention.3} parent=1 // pred_check
      %p96 = pneg %p46
    $region27: #{multi_head_attention.3} parent=1 // pred_check_branch
      %98 = sbr.rel (%p96) target = $region29
    $region28: #{multi_head_attention.3} parent=1 // pred_region
      %v99 = vld [vmem:[#allocation2] sm:$0xff]
      %v100 = vld [vmem:[#allocation2 + $0x8] sm:$0xff]
      %v101 = vld [vmem:[%s2] sm:$0x1]
      %v103 = vperm.slane %v101, 0
      %v105 = vadd.f32 %v99, %v103
      %v106 = vadd.f32 %v100, %v103
      %107 = vst.msk [vmem:[%s3] sm:$0xff] %vm93, %v105
      %108 = vst.msk [vmem:[%s3 + $0x8] sm:$0xff] %vm93, %v106
    $region29: #{multi_head_attention.3} parent=1 // pred_fallthru
      _
    // Predicated region
    $region30: #{multi_head_attention.3} parent=1 // pred_check
      _
    $region31: #{multi_head_attention.3} parent=1 // pred_check_branch
      %110 = sbr.rel (0) target = $region33
    $region32: #{multi_head_attention.3} parent=1 // pred_region
      _
    $region33: #{multi_head_attention.3} parent=1 // pred_fallthru
      _
    // Predicated region
    $region34: #{multi_head_attention.3} parent=1 // pred_check
      _
    $region35: #{multi_head_attention.3} parent=1 // pred_check_branch
      %112 = sbr.rel (0) target = $region37
    $region36: #{multi_head_attention.3} parent=1 // pred_region
      _
    $region37: #{multi_head_attention.3} parent=1 // pred_fallthru
      _
    %113 = vsyncpa [#allocation4], 1
    %114 = vsyncpa [#allocation6], 1

// kernel: multi_head_attention.4
$region0: #{multi_head_attention.4}
  #allocation0 [shape = 'u32[]', space=smem, size = 0x4, offset = 0x4, fixed_abs, tag = 'smem constant byte address 0x4 - core index']
  #allocation1 [shape = 'u32[72,128]{1,0:T(1,128)}', space=vmem, size = 0x9000, scoped, tag = 'internal scratch']
  #allocation2 [shape = 'f32[4,8,8]{2,1,0:T(8,128)}', space=vmem, size = 0x4000, scoped, tag = 'scratch operand']
  %s0 = inlined_call_operand.vmem [shape: f32[2,4,8,8], index: 0, kind: input, shape index: {}]
  %s1 = inlined_call_operand.vmem [shape: f32[2,4,8,8], index: 1, kind: input, shape index: {}]
  %s2 = inlined_call_operand.vmem [shape: f32[2,4,8,8], index: 2, kind: input, shape index: {}]
  %s3 = inlined_call_operand.vmem [shape: f32[2,8,32], index: 3, kind: output, shape index: {}]
  %s4 = sld [smem:[#allocation0]]
  $region53: #{multi_head_attention.4} parent=0
    _
  %s6 = ssub.s32 1, %s4
  %s7 = scalar_select 0, %s6, %s4
  loop: start=0, step=1, limit=4
  $region2: #{multi_head_attention.4} parent=0 // loop_pre_header
    _
  $region3: #{multi_head_attention.4} parent=0 // loop_header
    %s9 = sphi 0, %s13
    %p10 = scmp.ge.s32.totalorder %s9, 4
    %s16 = sphi 0, %s35
    %s17 = sphi 0, %s31
    %s18 = sphi 0, %s27
    %s19 = sphi 0, %s16
    %s20 = sphi 0, %s17
    %s21 = sphi 0, %s18
    %s22 = sphi 0, %s19
    %s23 = sphi 0, %s20
    %s24 = sphi 0, %s21
    %s40 = sphi 0, %s42
    %s43 = sphi 0, %s40
    %s44 = sphi 0, %s43
    %s60 = sphi 0, %s44
    %s68 = sphi 0, %s70
    %s71 = sphi 0, %s68
    %s72 = sphi 0, %s71
    %s88 = sphi 0, %s72
    %s96 = sphi 0, %s98
    %s99 = sphi 0, %s96
    %s100 = sphi 0, %s99
    %s116 = sphi 0, %s100
    %s124 = sphi 0, %s126
    %s127 = sphi 0, %s124
    %s128 = sphi 0, %s127
    %s144 = sphi 0, %s128
  $region4: #{multi_head_attention.4} parent=0 // loop_header_branch
    %12 = sbr.rel (%p10) target = $region8
  $region5: #{multi_head_attention.4} parent=0 // loop_body
    %s14 = ssub.s32 %s9, 1
    %s15 = ssub.s32 %s9, 2
    %s25 = sadd.s32 1, %s18
    %p26 = scmp.ge.s32.totalorder %s25, 1
    %s27 = scalar_select %p26, 0, %s25
    %s28 = sadd.s32 1, %s17
    %s29 = scalar_select %p26, %s28, %s17
    %p30 = scmp.ge.s32.totalorder %s29, 1
    %s31 = scalar_select %p30, 0, %s29
    %s32 = sadd.s32 1, %s16
    %s33 = scalar_select %p30, %s32, %s16
    %p34 = scmp.ge.s32.totalorder %s33, 2
    %s35 = scalar_select %p34, 0, %s33
    %s36 = ssub.s32 %s16, %s35
    %s37 = ssub.s32 %s17, %s31
    %s38 = sor.u32 %s36, %s37
    %p39 = scmp.eq.s32.totalorder %s38, 0
    %s41 = sadd.s32 %s40, 1
    %s42 = scalar_select %p39, %s40, %s41
    %p45 = pneg %p39
    %p46 = scmp.eq.s32.totalorder %s9, 1
    %p47 = por %p45, %p46
    %p48 = scmp.ne.s32.totalorder %s40, %s43
    %p49 = scmp.eq.s32.totalorder %s9, 0
    %p50 = por %p48, %p49
    %p51 = scmp.ne.s32.totalorder %s40, %s43
    %p52 = scmp.eq.s32.totalorder %s14, 1
    %p53 = por %p51, %p52
    %p54 = scmp.ne.s32.totalorder %s43, %s44
    %p55 = scmp.eq.s32.totalorder %s14, 0
    %p56 = por %p54, %p55
    %p57 = scmp.ne.s32.totalorder %s43, %s44
    %p58 = scmp.eq.s32.totalorder %s15, 1
    %p59 = por %p57, %p58
    %p61 = scmp.ne.s32.totalorder %s44, %s60
    %p62 = scmp.eq.s32.totalorder %s15, 0
    %p63 = por %p61, %p62
    %s64 = ssub.s32 %s16, %s35
    %s65 = ssub.s32 %s18, %s27
    %s66 = sor.u32 %s64, %s65
    %p67 = scmp.eq.s32.totalorder %s66, 0
    %s69 = sadd.s32 %s68, 1
    %s70 = scalar_select %p67, %s68, %s69
    %p73 = pneg %p67
    %p74 = scmp.eq.s32.totalorder %s9, 1
    %p75 = por %p73, %p74
    %p76 = scmp.ne.s32.totalorder %s68, %s71
    %p77 = scmp.eq.s32.totalorder %s9, 0
    %p78 = por %p76, %p77
    %p79 = scmp.ne.s32.totalorder %s68, %s71
    %p80 = scmp.eq.s32.totalorder %s14, 1
    %p81 = por %p79, %p80
    %p82 = scmp.ne.s32.totalorder %s71, %s72
    %p83 = scmp.eq.s32.totalorder %s14, 0
    %p84 = por %p82, %p83
    %p85 = scmp.ne.s32.totalorder %s71, %s72
    %p86 = scmp.eq.s32.totalorder %s15, 1
    %p87 = por %p85, %p86
    %p89 = scmp.ne.s32.totalorder %s72, %s88
    %p90 = scmp.eq.s32.totalorder %s15, 0
    %p91 = por %p89, %p90
    %s92 = ssub.s32 %s16, %s35
    %s93 = ssub.s32 %s18, %s27
    %s94 = sor.u32 %s92, %s93
    %p95 = scmp.eq.s32.totalorder %s94, 0
    %s97 = sadd.s32 %s96, 1
    %s98 = scalar_select %p95, %s96, %s97
    %p101 = pneg %p95
    %p102 = scmp.eq.s32.totalorder %s9, 1
    %p103 = por %p101, %p102
    %p104 = scmp.ne.s32.totalorder %s96, %s99
    %p105 = scmp.eq.s32.totalorder %s9, 0
    %p106 = por %p104, %p105
    %p107 = scmp.ne.s32.totalorder %s96, %s99
    %p108 = scmp.eq.s32.totalorder %s14, 1
    %p109 = por %p107, %p108
    %p110 = scmp.ne.s32.totalorder %s99, %s100
    %p111 = scmp.eq.s32.totalorder %s14, 0
    %p112 = por %p110, %p111
    %p113 = scmp.ne.s32.totalorder %s99, %s100
    %p114 = scmp.eq.s32.totalorder %s15, 1
    %p115 = por %p113, %p114
    %p117 = scmp.ne.s32.totalorder %s100, %s116
    %p118 = scmp.eq.s32.totalorder %s15, 0
    %p119 = por %p117, %p118
    %s120 = ssub.s32 %s16, %s35
    %s121 = ssub.s32 %s17, %s31
    %s122 = sor.u32 %s120, %s121
    %p123 = scmp.eq.s32.totalorder %s122, 0
    %s125 = sadd.s32 %s124, 1
    %s126 = scalar_select %p123, %s124, %s125
    %p129 = pneg %p123
    %p130 = scmp.eq.s32.totalorder %s9, 1
    %p131 = por %p129, %p130
    %p132 = scmp.ne.s32.totalorder %s124, %s127
    %p133 = scmp.eq.s32.totalorder %s9, 0
    %p134 = por %p132, %p133
    %p135 = scmp.ne.s32.totalorder %s124, %s127
    %p136 = scmp.eq.s32.totalorder %s14, 1
    %p137 = por %p135, %p136
    %p138 = scmp.ne.s32.totalorder %s127, %s128
    %p139 = scmp.eq.s32.totalorder %s14, 0
    %p140 = por %p138, %p139
    %p141 = scmp.ne.s32.totalorder %s127, %s128
    %p142 = scmp.eq.s32.totalorder %s15, 1
    %p143 = por %p141, %p142
    %p145 = scmp.ne.s32.totalorder %s128, %s144
    %p146 = scmp.eq.s32.totalorder %s15, 0
    %p147 = por %p145, %p146
    %p148 = scmp.le.s32.totalorder 1, %s9
    %p149 = scmp.lt.s32.totalorder %s9, 3
    %p150 = pnand %p148, %p149
    %p151 = pneg %p150
    // Predicated region
    $region9: #{multi_head_attention.4} parent=5 // pred_check
      _
    $region10: #{multi_head_attention.4} parent=5 // pred_check_branch
      %153 = sbr.rel (%p150) target = $region12
    $region11: #{multi_head_attention.4} parent=5 // pred_region
      %s154 = ssub.s32 %s9, 1
    $region12: #{multi_head_attention.4} parent=5 // pred_fallthru
      _
    %p155 = scmp.lt.s32.totalorder %s9, 2
    // Predicated region
    $region13: #{multi_head_attention.4} parent=5 // pred_check
      %p156 = pneg %p155
    $region14: #{multi_head_attention.4} parent=5 // pred_check_branch
      %158 = sbr.rel (%p156) target = $region16
    $region15: #{multi_head_attention.4} parent=5 // pred_region
      // Predicated region
      $region17: #{multi_head_attention.4} parent=15 // pred_check
        %p159 = pneg %p50
      $region18: #{multi_head_attention.4} parent=15 // pred_check_branch
        %161 = sbr.rel (%p159) target = $region20
      $region19: #{multi_head_attention.4} parent=15 // pred_region
        %p162 = scmp.lt.s32.totalorder %s16, 1
        %s163 = scalar_select %p162, %s16, 1
        %p164 = scmp.lt.s32.totalorder %s17, 0
        %s165 = scalar_select %p164, %s17, 0
        %s166 = smul.addr %s163, 4
        %s167 = sadd.s32 %s165, %s166
        %s168 = smul.addr %s167, 8
        %s169 = scalar_lea.vmem %s0, %s168
      $region20: #{multi_head_attention.4} parent=15 // pred_fallthru
        _
      // Predicated region
      $region21: #{multi_head_attention.4} parent=15 // pred_check
        %p170 = pneg %p78
      $region22: #{multi_head_attention.4} parent=15 // pred_check_branch
        %172 = sbr.rel (%p170) target = $region24
      $region23: #{multi_head_attention.4} parent=15 // pred_region
        %p173 = scmp.lt.s32.totalorder %s16, 1
        %s174 = scalar_select %p173, %s16, 1
        %p175 = scmp.lt.s32.totalorder %s18, 0
        %s176 = scalar_select %p175, %s18, 0
        %s177 = smul.addr %s174, 4
        %s178 = sadd.s32 %s176, %s177
        %s179 = smul.addr %s178, 8
        %s180 = scalar_lea.vmem %s1, %s179
      $region24: #{multi_head_attention.4} parent=15 // pred_fallthru
        _
      // Predicated region
      $region25: #{multi_head_attention.4} parent=15 // pred_check
        %p181 = pneg %p106
      $region26: #{multi_head_attention.4} parent=15 // pred_check_branch
        %183 = sbr.rel (%p181) target = $region28
      $region27: #{multi_head_attention.4} parent=15 // pred_region
        %p184 = scmp.lt.s32.totalorder %s16, 1
        %s185 = scalar_select %p184, %s16, 1
        %p186 = scmp.lt.s32.totalorder %s18, 0
        %s187 = scalar_select %p186, %s18, 0
        %s188 = smul.addr %s185, 4
        %s189 = sadd.s32 %s187, %s188
        %s190 = smul.addr %s189, 8
        %s191 = scalar_lea.vmem %s2, %s190
      $region28: #{multi_head_attention.4} parent=15 // pred_fallthru
        _
    $region16: #{multi_head_attention.4} parent=5 // pred_fallthru
      _
    %p192 = scmp.le.s32.totalorder 1, %s9
    %p193 = scmp.lt.s32.totalorder %s9, 3
    %p194 = pnand %p192, %p193
    %p195 = pneg %p194
    // Predicated region
    $region29: #{multi_head_attention.4} parent=5 // pred_check
      _
    $region30: #{multi_head_attention.4} parent=5 // pred_check_branch
      %197 = sbr.rel (%p194) target = $region32
    $region31: #{multi_head_attention.4} parent=5 // pred_region
      %s198 = ssub.s32 %s9, 1
      %p199 = scmp.lt.s32.totalorder %s19, 1
      %s200 = scalar_select %p199, %s19, 1
      %p201 = scmp.lt.s32.totalorder %s20, 0
      %s202 = scalar_select %p201, %s20, 0
      %s203 = smul.addr %s200, 4
      %s204 = sadd.s32 %s202, %s203
      %s205 = smul.addr %s204, 8
      %s206 = scalar_lea.vmem %s0, %s205
      %p207 = pneg %p56
      %p208 = pneg %p53
      %p209 = scmp.lt.s32.totalorder %s19, 1
      %s210 = scalar_select %p209, %s19, 1
      %p211 = scmp.lt.s32.totalorder %s21, 0
      %s212 = scalar_select %p211, %s21, 0
      %s213 = smul.addr %s210, 4
      %s214 = sadd.s32 %s212, %s213
      %s215 = smul.addr %s214, 8
      %s216 = scalar_lea.vmem %s1, %s215
      %p217 = pneg %p84
      %p218 = pneg %p81
      %p219 = scmp.lt.s32.totalorder %s19, 1
      %s220 = scalar_select %p219, %s19, 1
      %p221 = scmp.lt.s32.totalorder %s21, 0
      %s222 = scalar_select %p221, %s21, 0
      %s223 = smul.addr %s220, 4
      %s224 = sadd.s32 %s222, %s223
      %s225 = smul.addr %s224, 8
      %s226 = scalar_lea.vmem %s2, %s225
      %p227 = pneg %p112
      %p228 = pneg %p109
      %p229 = pneg %p140
      %p230 = pneg %p137
      %p231 = scmp.lt.s32.totalorder %s19, 1
      %s232 = scalar_select %p231, %s19, 1
      %p233 = scmp.lt.s32.totalorder %s20, 0
      %s234 = scalar_select %p233, %s20, 0
      %s235 = sadd.s32 %s234, %s232
      %s236 = smul.addr %s235, 8
      %s237 = scalar_lea.vmem %s3, %s236
      %p238 = scmp.lt.s32.totalorder %s19, 1
      %s239 = scalar_select %p238, %s19, 1
      %p240 = scmp.lt.s32.totalorder %s20, 0
      %s241 = scalar_select %p240, %s20, 0
      %s242 = smul.addr %s239, 4
      %s243 = sadd.s32 %s241, %s242
      %s244 = smul.addr %s243, 8
      %s245 = scalar_lea.vmem %s0, %s244
      %p246 = scmp.lt.s32.totalorder %s19, 1
      %s247 = scalar_select %p246, %s19, 1
      %p248 = scmp.lt.s32.totalorder %s21, 0
      %s249 = scalar_select %p248, %s21, 0
      %s250 = smul.addr %s247, 4
      %s251 = sadd.s32 %s249, %s250
      %s252 = smul.addr %s251, 8
      %s253 = scalar_lea.vmem %s1, %s252
      %p254 = scmp.lt.s32.totalorder %s19, 1
      %s255 = scalar_select %p254, %s19, 1
      %p256 = scmp.lt.s32.totalorder %s21, 0
      %s257 = scalar_select %p256, %s21, 0
      %s258 = smul.addr %s255, 4
      %s259 = sadd.s32 %s257, %s258
      %s260 = smul.addr %s259, 8
      %s261 = scalar_lea.vmem %s2, %s260
      %p262 = scmp.lt.s32.totalorder %s19, 1
      %s263 = scalar_select %p262, %s19, 1
      %p264 = scmp.lt.s32.totalorder %s20, 0
      %s265 = scalar_select %p264, %s20, 0
      %s266 = sadd.s32 %s265, %s263
      %s267 = smul.addr %s266, 8
      %s268 = scalar_lea.vmem %s3, %s267
      %p269 = scmp.eq.s32.totalorder %s21, 0
      // Predicated region
      $region33: #{multi_head_attention.4} parent=31 // pred_check
        %p270 = pneg %p269
      $region34: #{multi_head_attention.4} parent=31 // pred_check_branch
        %272 = sbr.rel (%p270) target = $region36
      $region35: #{multi_head_attention.4} parent=31 // pred_region
        %vm273 = vcmask 64512
        %274 = vst.msk [vmem:[#allocation2] sm:$0xff] %vm273, 0.0
        %275 = vst.msk [vmem:[#allocation2 + $0x8] sm:$0xff] %vm273, 0.0
        %276 = vst.msk [vmem:[#allocation2 + $0x10] sm:$0xff] %vm273, 0.0
        %277 = vst.msk [vmem:[#allocation2 + $0x18] sm:$0xff] %vm273, 0.0
      $region36: #{multi_head_attention.4} parent=31 // pred_fallthru
        _
      %v278 = vld [vmem:[%s245] sm:$0xff]
      %v279 = vld [vmem:[%s245 + $0x8] sm:$0xff]
      %v280 = vld [vmem:[%s245 + $0x10] sm:$0xff]
      %v281 = vld [vmem:[%s245 + $0x18] sm:$0xff]
      %v282 = vld [vmem:[%s253] sm:$0xff]
      %v283 = vld [vmem:[%s253 + $0x8] sm:$0xff]
      %v284 = vld [vmem:[%s253 + $0x10] sm:$0xff]
      %v285 = vld [vmem:[%s253 + $0x18] sm:$0xff]
      %v286 = vld [vmem:[%s261] sm:$0xff]
      %v287 = vld [vmem:[%s261 + $0x8] sm:$0xff]
      %v288 = vld [vmem:[%s261 + $0x10] sm:$0xff]
      %v289 = vld [vmem:[%s261 + $0x18] sm:$0xff]
      %vm290 = vcmask 64512
      %v292 = vsel %vm290, %v278, 0
      %v295 = vsel %vm290, %v282, 0
      %297 = vmatpush.xpose.msra.mxu0 0.0
      %298 = vmatpush.xpose.msra.mxu0 0.0
      %299 = vmatpush.xpose.msra.mxu0 0.0
      %300 = vmatpush.xpose.msra.mxu0 0.0
      %301 = vmatpush.xpose.msra.mxu0 0.0
      %302 = vmatpush.xpose.msra.mxu0 0.0
      %303 = vmatpush.xpose.msra.mxu0 0.0
      %304 = vmatpush.xpose.msra.mxu0 0.0
      %305 = vmatpush.xpose.msra.mxu0 0.0
      %306 = vmatpush.xpose.msra.mxu0 0.0
      %307 = vmatpush.xpose.msra.mxu0 0.0
      %308 = vmatpush.xpose.msra.mxu0 0.0
      %309 = vmatpush.xpose.msra.mxu0 0.0
      %310 = vmatpush.xpose.msra.mxu0 0.0
      %311 = vmatpush.xpose.msra.mxu0 0.0
      %312 = vmatpush.xpose.msra.mxu0 %v295
      %313 = vmatmul.f32.gmra.mxu0 %v292
      %v314 = vpop.f32.mrf.mxu0
      %v315 = vadd.f32 0.0, %v314
      %316 = vdwg.mxu0
      %v318 = vsel %vm290, %v279, 0
      %v321 = vsel %vm290, %v283, 0
      %323 = vmatpush.xpose.msra.mxu0 0.0
      %324 = vmatpush.xpose.msra.mxu0 0.0
      %325 = vmatpush.xpose.msra.mxu0 0.0
      %326 = vmatpush.xpose.msra.mxu0 0.0
      %327 = vmatpush.xpose.msra.mxu0 0.0
      %328 = vmatpush.xpose.msra.mxu0 0.0
      %329 = vmatpush.xpose.msra.mxu0 0.0
      %330 = vmatpush.xpose.msra.mxu0 0.0
      %331 = vmatpush.xpose.msra.mxu0 0.0
      %332 = vmatpush.xpose.msra.mxu0 0.0
      %333 = vmatpush.xpose.msra.mxu0 0.0
      %334 = vmatpush.xpose.msra.mxu0 0.0
      %335 = vmatpush.xpose.msra.mxu0 0.0
      %336 = vmatpush.xpose.msra.mxu0 0.0
      %337 = vmatpush.xpose.msra.mxu0 0.0
      %338 = vmatpush.xpose.msra.mxu0 %v321
      %339 = vmatmul.f32.gmra.mxu0 %v318
      %v340 = vpop.f32.mrf.mxu0
      %v341 = vadd.f32 0.0, %v340
      %342 = vdwg.mxu0
      %v344 = vsel %vm290, %v280, 0
      %v347 = vsel %vm290, %v284, 0
      %349 = vmatpush.xpose.msra.mxu0 0.0
      %350 = vmatpush.xpose.msra.mxu0 0.0
      %351 = vmatpush.xpose.msra.mxu0 0.0
      %352 = vmatpush.xpose.msra.mxu0 0.0
      %353 = vmatpush.xpose.msra.mxu0 0.0
      %354 = vmatpush.xpose.msra.mxu0 0.0
      %355 = vmatpush.xpose.msra.mxu0 0.0
      %356 = vmatpush.xpose.msra.mxu0 0.0
      %357 = vmatpush.xpose.msra.mxu0 0.0
      %358 = vmatpush.xpose.msra.mxu0 0.0
      %359 = vmatpush.xpose.msra.mxu0 0.0
      %360 = vmatpush.xpose.msra.mxu0 0.0
      %361 = vmatpush.xpose.msra.mxu0 0.0
      %362 = vmatpush.xpose.msra.mxu0 0.0
      %363 = vmatpush.xpose.msra.mxu0 0.0
      %364 = vmatpush.xpose.msra.mxu0 %v347
      %365 = vmatmul.f32.gmra.mxu0 %v344
      %v366 = vpop.f32.mrf.mxu0
      %v367 = vadd.f32 0.0, %v366
      %368 = vdwg.mxu0
      %v370 = vsel %vm290, %v281, 0
      %v373 = vsel %vm290, %v285, 0
      %375 = vmatpush.xpose.msra.mxu0 0.0
      %376 = vmatpush.xpose.msra.mxu0 0.0
      %377 = vmatpush.xpose.msra.mxu0 0.0
      %378 = vmatpush.xpose.msra.mxu0 0.0
      %379 = vmatpush.xpose.msra.mxu0 0.0
      %380 = vmatpush.xpose.msra.mxu0 0.0
      %381 = vmatpush.xpose.msra.mxu0 0.0
      %382 = vmatpush.xpose.msra.mxu0 0.0
      %383 = vmatpush.xpose.msra.mxu0 0.0
      %384 = vmatpush.xpose.msra.mxu0 0.0
      %385 = vmatpush.xpose.msra.mxu0 0.0
      %386 = vmatpush.xpose.msra.mxu0 0.0
      %387 = vmatpush.xpose.msra.mxu0 0.0
      %388 = vmatpush.xpose.msra.mxu0 0.0
      %389 = vmatpush.xpose.msra.mxu0 0.0
      %390 = vmatpush.xpose.msra.mxu0 %v373
      %391 = vmatmul.f32.gmra.mxu0 %v370
      %v392 = vpop.f32.mrf.mxu0
      %v393 = vadd.f32 0.0, %v392
      %394 = vdwg.mxu0
      %v395 = vld [vmem:[#allocation2] sm:$0xff]
      %v396 = vld [vmem:[#allocation2 + $0x8] sm:$0xff]
      %v397 = vld [vmem:[#allocation2 + $0x10] sm:$0xff]
      %v398 = vld [vmem:[#allocation2 + $0x18] sm:$0xff]
      %v400 = vsel %vm290, %v315, 0
      %402 = vmatpush.msra.mxu0 0.0
      %403 = vmatpush.msra.mxu0 0.0
      %404 = vmatpush.msra.mxu0 0.0
      %405 = vmatpush.msra.mxu0 0.0
      %406 = vmatpush.msra.mxu0 0.0
      %407 = vmatpush.msra.mxu0 0.0
      %408 = vmatpush.msra.mxu0 0.0
      %409 = vmatpush.msra.mxu0 0.0
      %410 = vmatpush.msra.mxu0 0.0
      %411 = vmatpush.msra.mxu0 0.0
      %412 = vmatpush.msra.mxu0 0.0
      %413 = vmatpush.msra.mxu0 0.0
      %414 = vmatpush.msra.mxu0 0.0
      %415 = vmatpush.msra.mxu0 0.0
      %416 = vmatpush.msra.mxu0 0.0
      %417 = vmatpush.msra.mxu0 %v286
      %418 = vmatmul.f32.gmra.mxu0 %v400
      %v419 = vpop.f32.mrf.mxu0
      %v420 = vadd.f32 0.0, %v419
      %421 = vdwg.mxu0
      %v423 = vsel %vm290, %v341, 0
      %425 = vmatpush.msra.mxu0 0.0
      %426 = vmatpush.msra.mxu0 0.0
      %427 = vmatpush.msra.mxu0 0.0
      %428 = vmatpush.msra.mxu0 0.0
      %429 = vmatpush.msra.mxu0 0.0
      %430 = vmatpush.msra.mxu0 0.0
      %431 = vmatpush.msra.mxu0 0.0
      %432 = vmatpush.msra.mxu0 0.0
      %433 = vmatpush.msra.mxu0 0.0
      %434 = vmatpush.msra.mxu0 0.0
      %435 = vmatpush.msra.mxu0 0.0
      %436 = vmatpush.msra.mxu0 0.0
      %437 = vmatpush.msra.mxu0 0.0
      %438 = vmatpush.msra.mxu0 0.0
      %439 = vmatpush.msra.mxu0 0.0
      %440 = vmatpush.msra.mxu0 %v287
      %441 = vmatmul.f32.gmra.mxu0 %v423
      %v442 = vpop.f32.mrf.mxu0
      %v443 = vadd.f32 0.0, %v442
      %444 = vdwg.mxu0
      %v446 = vsel %vm290, %v367, 0
      %448 = vmatpush.msra.mxu0 0.0
      %449 = vmatpush.msra.mxu0 0.0
      %450 = vmatpush.msra.mxu0 0.0
      %451 = vmatpush.msra.mxu0 0.0
      %452 = vmatpush.msra.mxu0 0.0
      %453 = vmatpush.msra.mxu0 0.0
      %454 = vmatpush.msra.mxu0 0.0
      %455 = vmatpush.msra.mxu0 0.0
      %456 = vmatpush.msra.mxu0 0.0
      %457 = vmatpush.msra.mxu0 0.0
      %458 = vmatpush.msra.mxu0 0.0
      %459 = vmatpush.msra.mxu0 0.0
      %460 = vmatpush.msra.mxu0 0.0
      %461 = vmatpush.msra.mxu0 0.0
      %462 = vmatpush.msra.mxu0 0.0
      %463 = vmatpush.msra.mxu0 %v288
      %464 = vmatmul.f32.gmra.mxu0 %v446
      %v465 = vpop.f32.mrf.mxu0
      %v466 = vadd.f32 0.0, %v465
      %467 = vdwg.mxu0
      %v469 = vsel %vm290, %v393, 0
      %471 = vmatpush.msra.mxu0 0.0
      %472 = vmatpush.msra.mxu0 0.0
      %473 = vmatpush.msra.mxu0 0.0
      %474 = vmatpush.msra.mxu0 0.0
      %475 = vmatpush.msra.mxu0 0.0
      %476 = vmatpush.msra.mxu0 0.0
      %477 = vmatpush.msra.mxu0 0.0
      %478 = vmatpush.msra.mxu0 0.0
      %479 = vmatpush.msra.mxu0 0.0
      %480 = vmatpush.msra.mxu0 0.0
      %481 = vmatpush.msra.mxu0 0.0
      %482 = vmatpush.msra.mxu0 0.0
      %483 = vmatpush.msra.mxu0 0.0
      %484 = vmatpush.msra.mxu0 0.0
      %485 = vmatpush.msra.mxu0 0.0
      %486 = vmatpush.msra.mxu0 %v289
      %487 = vmatmul.f32.gmra.mxu0 %v469
      %v488 = vpop.f32.mrf.mxu0
      %v489 = vadd.f32 0.0, %v488
      %490 = vdwg.mxu0
      %v491 = vadd.f32 %v395, %v420
      %v492 = vadd.f32 %v396, %v443
      %v493 = vadd.f32 %v397, %v466
      %v494 = vadd.f32 %v398, %v489
      %495 = vst.msk [vmem:[#allocation2] sm:$0xff] %vm290, %v491
      %496 = vst.msk [vmem:[#allocation2 + $0x8] sm:$0xff] %vm290, %v492
      %497 = vst.msk [vmem:[#allocation2 + $0x10] sm:$0xff] %vm290, %v493
      %498 = vst.msk [vmem:[#allocation2 + $0x18] sm:$0xff] %vm290, %v494
      // Predicated region
      $region37: #{multi_head_attention.4} parent=31 // pred_check
        %p499 = pneg %p269
      $region38: #{multi_head_attention.4} parent=31 // pred_check_branch
        %501 = sbr.rel (%p499) target = $region40
      $region39: #{multi_head_attention.4} parent=31 // pred_region
        %v502 = vld [vmem:[#allocation2] sm:$0xff]
        %v503 = vld [vmem:[#allocation2 + $0x8] sm:$0xff]
        %v504 = vld [vmem:[#allocation2 + $0x10] sm:$0xff]
        %v505 = vld [vmem:[#allocation2 + $0x18] sm:$0xff]
        %v506 = vmul.f32 %v502, 0.35355338
        %v507 = vmul.f32 %v503, 0.35355338
        %v508 = vmul.f32 %v504, 0.35355338
        %v509 = vmul.f32 %v505, 0.35355338
        %511 = vrot.lane.b32.xlu0 %v507, 8
        %v512 = vpop.permute.xlu0 %511
        %515 = vrot.lane.b32.xlu0 %v508, 16
        %v516 = vpop.permute.xlu0 %515
        %519 = vrot.lane.b32.xlu0 %v509, 24
        %v520 = vpop.permute.xlu0 %519
        %v522 = vsel %vm290, %v506, %v512
        %vm523 = vcmask 130048
        %v524 = vsel %vm523, %v522, %v516
        %vm525 = vcmask 195584
        %v526 = vsel %vm525, %v524, %v520
        %vm527 = vcmask 261120
        %528 = vst.msk [vmem:[%s268] sm:$0xff] %vm527, %v526
      $region40: #{multi_head_attention.4} parent=31 // pred_fallthru
        _
      %p529 = scmp.lt.s32.totalorder %s19, 1
      %s530 = scalar_select %p529, %s19, 1
      %p531 = scmp.lt.s32.totalorder %s20, 0
      %s532 = scalar_select %p531, %s20, 0
      %s533 = sadd.s32 %s532, %s530
      %s534 = smul.addr %s533, 8
      %s535 = scalar_lea.vmem %s3, %s534
      // Predicated region
      $region41: #{multi_head_attention.4} parent=31 // pred_check
        %p536 = pneg %p137
      $region42: #{multi_head_attention.4} parent=31 // pred_check_branch
        %538 = sbr.rel (%p536) target = $region44
      $region43: #{multi_head_attention.4} parent=31 // pred_region
        _
      $region44: #{multi_head_attention.4} parent=31 // pred_fallthru
        _
    $region32: #{multi_head_attention.4} parent=5 // pred_fallthru
      _
    %p539 = scmp.le.s32.totalorder 2, %s9
    // Predicated region
    $region45: #{multi_head_attention.4} parent=5 // pred_check
      %p540 = pneg %p539
    $region46: #{multi_head_attention.4} parent=5 // pred_check_branch
      %542 = sbr.rel (%p540) target = $region48
    $region47: #{multi_head_attention.4} parent=5 // pred_region
      %s543 = ssub.s32 %s9, 2
      // Predicated region
      $region49: #{multi_head_attention.4} parent=47 // pred_check
        %p544 = pneg %p143
      $region50: #{multi_head_attention.4} parent=47 // pred_check_branch
        %546 = sbr.rel (%p544) target = $region52
      $region51: #{multi_head_attention.4} parent=47 // pred_region
        %p547 = scmp.lt.s32.totalorder %s22, 1
        %s548 = scalar_select %p547, %s22, 1
        %p549 = scmp.lt.s32.totalorder %s23, 0
        %s550 = scalar_select %p549, %s23, 0
        %s551 = sadd.s32 %s550, %s548
        %s552 = smul.addr %s551, 8
        %s553 = scalar_lea.vmem %s3, %s552
      $region52: #{multi_head_attention.4} parent=47 // pred_fallthru
        _
    $region48: #{multi_head_attention.4} parent=5 // pred_fallthru
      _
  $region6: #{multi_head_attention.4} parent=0 // loop_footer
    %s13 = sadd.s32 1, %s9
  $region7: #{multi_head_attention.4} parent=0 // loop_footer_branch
    %8 = sbr.rel target = $region3
  $region8: #{multi_head_attention.4} parent=0 // loop_exit
    _

</llo_original>
